<compile_context>
chip_gen: v7x
topology: tpu7x:2x2x1
jax: 0.10.0
libtpu: 0.0.40
codegen_flags: <defaults>
</compile_context>

<pallas_src>
import jax
import jax.numpy as jnp
from jax.experimental import pallas as pl
from jax.experimental.pallas import tpu as pltpu

EPS = 1e-5  # PyTorch LayerNorm default


def linear_relu_ln_kernel(x_ref, w_ref, p_ref, o_ref):
    # x_ref: (tm, C_in)   w_ref: (C_in, C_out)   p_ref: (3, C_out) = [bias; gamma; beta]
    y = jnp.dot(x_ref[...], w_ref[...], preferred_element_type=jnp.float32)
    y = y + p_ref[0:1, :]
    y = jnp.maximum(y, 0.0)  # ReLU
    # LayerNorm over the last dim (biased variance, like torch), single pass:
    inv_n = jnp.float32(1.0 / y.shape[-1])
    mean = jnp.sum(y, axis=-1, keepdims=True) * inv_n
    mean_sq = jnp.sum(y * y, axis=-1, keepdims=True) * inv_n
    var = mean_sq - mean * mean
    normed = (y - mean) * jax.lax.rsqrt(var + EPS)
    o_ref[...] = (normed * p_ref[1:2, :] + p_ref[2:3, :]).astype(o_ref.dtype)


def _round_up(n, m):
    return ((n + m - 1) // m) * m


def _build_call(m_pad, c_in, c_out, tm, out_dtype, single_buffer_invariants):
    # Weight and the fused bias/gamma/beta slab never change across grid steps;
    # single-buffering them halves their VMEM footprint (matters for big C_in/C_out).
    inv_kwargs = {}
    if single_buffer_invariants:
        inv_kwargs = dict(pipeline_mode=pl.Buffered(1))
    return pl.pallas_call(
        linear_relu_ln_kernel,
        out_shape=jax.ShapeDtypeStruct((m_pad, c_out), out_dtype),
        grid_spec=pltpu.PrefetchScalarGridSpec(
            num_scalar_prefetch=0,
            grid=(m_pad // tm,),
            in_specs=[
                pl.BlockSpec((tm, c_in), lambda i: (i, 0)),
                pl.BlockSpec((c_in, c_out), lambda i: (0, 0), **inv_kwargs),
                pl.BlockSpec((3, c_out), lambda i: (0, 0), **inv_kwargs),
            ],
            out_specs=pl.BlockSpec((tm, c_out), lambda i: (i, 0)),
        ),
        compiler_params=pltpu.CompilerParams(
            dimension_semantics=("parallel",),
            vmem_limit_bytes=48 * 1024 * 1024,  # explicit; safe on v5e/v6e (128 MiB) and v7x (64 MiB)
        ),
    )


def linear_layer_forward(x, weight, bias, gamma, beta, *, tm=512):
    """x: [..., C_in], weight: [C_out, C_in] (PyTorch layout), bias/gamma/beta: [C_out]."""
    orig_shape = x.shape
    c_in = orig_shape[-1]
    c_out = weight.shape[0]
    x2d = x.reshape(-1, c_in)
    M = x2d.shape[0]

    # Large row tile to fill the MXU rows and amortize per-grid-step overhead,
    # capped at the (sublane-rounded) row count so tiny inputs still work.
    tm_eff = min(tm, _round_up(M, 8))
    M_pad = _round_up(M, tm_eff)
    if M_pad != M:
        x2d = jnp.pad(x2d, ((0, M_pad - M), (0, 0)))

    w_t = weight.T                                    # (C_in, C_out)
    params = jnp.stack([bias, gamma, beta], axis=0)   # (3, C_out) fused slab

    try:
        out = jax.block_until_ready(
            _build_call(M_pad, c_in, c_out, tm_eff, x.dtype, True)(x2d, w_t, params)
        )
    except Exception:
        # Fallback if this JAX build rejects single-buffered (Buffered(1)) block specs.
        out = _build_call(M_pad, c_in, c_out, tm_eff, x.dtype, False)(x2d, w_t, params)

    out = out[:M]
    return out.reshape(*orig_shape[:-1], c_out)


def _reference(x, weight, bias, gamma, beta):
    ref = jnp.maximum(x @ weight.T + bias, 0.0)
    mean = ref.mean(-1, keepdims=True)
    var = ((ref - mean) ** 2).mean(-1, keepdims=True)
    return (ref - mean) / jnp.sqrt(var + EPS) * gamma + beta


if __name__ == "__main__":
    B, S, C_IN, C_OUT = 2, 8, 32, 128

    key = jax.random.PRNGKey(0)
    kx, kw, kb = jax.random.split(key, 3)

    x = jax.random.normal(kx, (B, S, C_IN), dtype=jnp.float32)

    # Deterministic parameter init (matching PyTorch nn.Linear default ranges).
    bound = 1.0 / (C_IN ** 0.5)
    weight = jax.random.uniform(kw, (C_OUT, C_IN), minval=-bound, maxval=bound, dtype=jnp.float32)
    bias = jax.random.uniform(kb, (C_OUT,), minval=-bound, maxval=bound, dtype=jnp.float32)
    gamma = jnp.ones((C_OUT,), dtype=jnp.float32)   # LayerNorm weight default
    beta = jnp.zeros((C_OUT,), dtype=jnp.float32)   # LayerNorm bias default

    out = linear_layer_forward(x, weight, bias, gamma, beta)
    out = jax.block_until_ready(out)

    ref = _reference(x, weight, bias, gamma, beta)
    assert out.shape == (B, S, C_OUT)
    assert jnp.allclose(out, ref, atol=1e-5, rtol=1e-5)

    # Exercise the padded-tail path (row count not a multiple of the tile / sublane count).
    x_odd = jax.random.normal(jax.random.PRNGKey(1), (3, 7, C_IN), dtype=jnp.float32)
    out_odd = jax.block_until_ready(linear_layer_forward(x_odd, weight, bias, gamma, beta))
    ref_odd = _reference(x_odd, weight, bias, gamma, beta)
    assert out_odd.shape == (3, 7, C_OUT)
    assert jnp.allclose(out_odd, ref_odd, atol=1e-5, rtol=1e-5)

    print("KERNEL_OK")
</pallas_src>

<mosaic_0001>
module attributes {stable_mosaic.version = 11 : i64} {
  func.func @linear_relu_ln_kernel(%arg0: i32, %arg1: memref<16x32xf32, #tpu.memory_space<vmem>>, %arg2: memref<32x128xf32, #tpu.memory_space<vmem>>, %arg3: memref<3x128xf32, #tpu.memory_space<vmem>>, %arg4: memref<16x128xf32, #tpu.memory_space<vmem>>) attributes {dimension_semantics = [#tpu.dimension_semantics<parallel>], iteration_bounds = array<i64: 1>, scalar_prefetch = 0 : i64, scratch_operands = 0 : i64, tpu.core_type = #tpu.core_type<tc>, window_params = [{transform_indices = @transform_0, window_bounds = array<i64: 16, 32>}, {pipeline_mode = #tpu.pipeline_mode<synchronous>, transform_indices = @transform_1, window_bounds = array<i64: 32, 128>}, {pipeline_mode = #tpu.pipeline_mode<synchronous>, transform_indices = @transform_2, window_bounds = array<i64: 3, 128>}, {transform_indices = @transform_3, window_bounds = array<i64: 16, 128>}]} {
    %c0 = arith.constant 0 : index
    %c0_0 = arith.constant 0 : index
    %0 = vector.load %arg1[%c0, %c0_0] : memref<16x32xf32, #tpu.memory_space<vmem>>, vector<16x32xf32>
    %c0_1 = arith.constant 0 : index
    %c0_2 = arith.constant 0 : index
    %1 = vector.load %arg2[%c0_1, %c0_2] : memref<32x128xf32, #tpu.memory_space<vmem>>, vector<32x128xf32>
    %cst = arith.constant dense<0.000000e+00> : vector<16x128xf32>
    %2 = tpu.matmul %0, %1, %cst {dimension_numbers = #tpu.dot_dimension_numbers<[1], [0], [0], [1], [0, 0, 1, 1], [], []>} : vector<16x32xf32>, vector<32x128xf32>, vector<16x128xf32> -> vector<16x128xf32>
    %c0_3 = arith.constant 0 : index
    %c0_4 = arith.constant 0 : index
    %3 = vector.load %arg3[%c0_3, %c0_4] : memref<3x128xf32, #tpu.memory_space<vmem>>, vector<1x128xf32>
    %4 = vector.broadcast %3 : vector<1x128xf32> to vector<16x128xf32>
    %5 = arith.addf %2, %4 : vector<16x128xf32>
    %cst_5 = arith.constant 0.000000e+00 : f32
    %6 = vector.broadcast %cst_5 : f32 to vector<16x128xf32>
    %7 = arith.maximumf %5, %6 : vector<16x128xf32>
    %cst_6 = arith.constant dense<0.000000e+00> : vector<16xf32>
    %8 = vector.multi_reduction <add>, %7, %cst_6 [1] : vector<16x128xf32> to vector<16xf32>
    %9 = vector.shape_cast %8 : vector<16xf32> to vector<16x1xf32>
    %cst_7 = arith.constant 7.812500e-03 : f32
    %10 = vector.broadcast %cst_7 : f32 to vector<16x1xf32>
    %11 = arith.mulf %9, %10 : vector<16x1xf32>
    %12 = arith.mulf %7, %7 : vector<16x128xf32>
    %cst_8 = arith.constant dense<0.000000e+00> : vector<16xf32>
    %13 = vector.multi_reduction <add>, %12, %cst_8 [1] : vector<16x128xf32> to vector<16xf32>
    %14 = vector.shape_cast %13 : vector<16xf32> to vector<16x1xf32>
    %cst_9 = arith.constant 7.812500e-03 : f32
    %15 = vector.broadcast %cst_9 : f32 to vector<16x1xf32>
    %16 = arith.mulf %14, %15 : vector<16x1xf32>
    %17 = arith.mulf %11, %11 : vector<16x1xf32>
    %18 = arith.subf %16, %17 : vector<16x1xf32>
    %19 = vector.broadcast %11 : vector<16x1xf32> to vector<16x128xf32>
    %20 = arith.subf %7, %19 : vector<16x128xf32>
    %cst_10 = arith.constant 9.99999974E-6 : f32
    %21 = vector.broadcast %cst_10 : f32 to vector<16x1xf32>
    %22 = arith.addf %18, %21 : vector<16x1xf32>
    %23 = math.rsqrt %22 : vector<16x1xf32>
    %24 = vector.broadcast %23 : vector<16x1xf32> to vector<16x128xf32>
    %25 = arith.mulf %20, %24 : vector<16x128xf32>
    %c1 = arith.constant 1 : index
    %c0_11 = arith.constant 0 : index
    %26 = vector.load %arg3[%c1, %c0_11] : memref<3x128xf32, #tpu.memory_space<vmem>>, vector<1x128xf32>
    %27 = vector.broadcast %26 : vector<1x128xf32> to vector<16x128xf32>
    %28 = arith.mulf %25, %27 : vector<16x128xf32>
    %c2 = arith.constant 2 : index
    %c0_12 = arith.constant 0 : index
    %29 = vector.load %arg3[%c2, %c0_12] : memref<3x128xf32, #tpu.memory_space<vmem>>, vector<1x128xf32>
    %30 = vector.broadcast %29 : vector<1x128xf32> to vector<16x128xf32>
    %31 = arith.addf %28, %30 : vector<16x128xf32>
    %c0_13 = arith.constant 0 : index
    %c0_14 = arith.constant 0 : index
    %32 = vector.load %arg4[%c0_13, %c0_14] : memref<16x128xf32, #tpu.memory_space<vmem>>, vector<16x128xf32>
    tpu.vector_store %arg4[%c0_13, %c0_14], %31 {strides = array<i32>} : memref<16x128xf32, #tpu.memory_space<vmem>>, vector<16x128xf32>,
    return
  }
  func.func @transform_0(%arg0: i32) -> (i32, i32) {
    %c0_i32 = arith.constant 0 : i32
    %c0_i32_0 = arith.constant 0 : i32
    return %arg0, %c0_i32 : i32, i32
  }
  func.func @transform_1(%arg0: i32) -> (i32, i32) {
    %c0_i32 = arith.constant 0 : i32
    %c0_i32_0 = arith.constant 0 : i32
    %c0_i32_1 = arith.constant 0 : i32
    return %c0_i32, %c0_i32_0 : i32, i32
  }
  func.func @transform_2(%arg0: i32) -> (i32, i32) {
    %c0_i32 = arith.constant 0 : i32
    %c0_i32_0 = arith.constant 0 : i32
    %c0_i32_1 = arith.constant 0 : i32
    return %c0_i32, %c0_i32_0 : i32, i32
  }
  func.func @transform_3(%arg0: i32) -> (i32, i32) {
    %c0_i32 = arith.constant 0 : i32
    %c0_i32_0 = arith.constant 0 : i32
    return %arg0, %c0_i32 : i32, i32
  }
}

module attributes {stable_mosaic.version = 11 : i64} {
  func.func @linear_relu_ln_kernel(%arg0: i32, %arg1: memref<16x32xf32, #tpu.memory_space<vmem>>, %arg2: memref<32x128xf32, #tpu.memory_space<vmem>>, %arg3: memref<3x128xf32, #tpu.memory_space<vmem>>, %arg4: memref<16x128xf32, #tpu.memory_space<vmem>>) attributes {dimension_semantics = [#tpu.dimension_semantics<parallel>], iteration_bounds = array<i64: 1>, scalar_prefetch = 0 : i64, scratch_operands = 0 : i64, tpu.core_type = #tpu.core_type<tc>, window_params = [{transform_indices = @transform_0, window_bounds = array<i64: 16, 32>}, {pipeline_mode = #tpu.pipeline_mode<synchronous>, transform_indices = @transform_1, window_bounds = array<i64: 32, 128>}, {pipeline_mode = #tpu.pipeline_mode<synchronous>, transform_indices = @transform_2, window_bounds = array<i64: 3, 128>}, {transform_indices = @transform_3, window_bounds = array<i64: 16, 128>}]} {
    %c0 = arith.constant 0 : index
    %c0_0 = arith.constant 0 : index
    %0 = vector.load %arg1[%c0, %c0_0] : memref<16x32xf32, #tpu.memory_space<vmem>>, vector<16x32xf32>
    %c0_1 = arith.constant 0 : index
    %c0_2 = arith.constant 0 : index
    %1 = vector.load %arg2[%c0_1, %c0_2] : memref<32x128xf32, #tpu.memory_space<vmem>>, vector<32x128xf32>
    %cst = arith.constant dense<0.000000e+00> : vector<16x128xf32>
    %2 = tpu.matmul %0, %1, %cst {dimension_numbers = #tpu.dot_dimension_numbers<[1], [0], [0], [1], [0, 0, 1, 1], [], []>} : vector<16x32xf32>, vector<32x128xf32>, vector<16x128xf32> -> vector<16x128xf32>
    %c0_3 = arith.constant 0 : index
    %c0_4 = arith.constant 0 : index
    %3 = vector.load %arg3[%c0_3, %c0_4] : memref<3x128xf32, #tpu.memory_space<vmem>>, vector<1x128xf32>
    %4 = vector.broadcast %3 : vector<1x128xf32> to vector<16x128xf32>
    %5 = arith.addf %2, %4 : vector<16x128xf32>
    %cst_5 = arith.constant 0.000000e+00 : f32
    %6 = vector.broadcast %cst_5 : f32 to vector<16x128xf32>
    %7 = arith.maximumf %5, %6 : vector<16x128xf32>
    %cst_6 = arith.constant dense<0.000000e+00> : vector<16xf32>
    %8 = vector.multi_reduction <add>, %7, %cst_6 [1] : vector<16x128xf32> to vector<16xf32>
    %9 = vector.shape_cast %8 : vector<16xf32> to vector<16x1xf32>
    %cst_7 = arith.constant 7.812500e-03 : f32
    %10 = vector.broadcast %cst_7 : f32 to vector<16x1xf32>
    %11 = arith.mulf %9, %10 : vector<16x1xf32>
    %12 = arith.mulf %7, %7 : vector<16x128xf32>
    %cst_8 = arith.constant dense<0.000000e+00> : vector<16xf32>
    %13 = vector.multi_reduction <add>, %12, %cst_8 [1] : vector<16x128xf32> to vector<16xf32>
    %14 = vector.shape_cast %13 : vector<16xf32> to vector<16x1xf32>
    %cst_9 = arith.constant 7.812500e-03 : f32
    %15 = vector.broadcast %cst_9 : f32 to vector<16x1xf32>
    %16 = arith.mulf %14, %15 : vector<16x1xf32>
    %17 = arith.mulf %11, %11 : vector<16x1xf32>
    %18 = arith.subf %16, %17 : vector<16x1xf32>
    %19 = vector.broadcast %11 : vector<16x1xf32> to vector<16x128xf32>
    %20 = arith.subf %7, %19 : vector<16x128xf32>
    %cst_10 = arith.constant 9.99999974E-6 : f32
    %21 = vector.broadcast %cst_10 : f32 to vector<16x1xf32>
    %22 = arith.addf %18, %21 : vector<16x1xf32>
    %23 = math.rsqrt %22 : vector<16x1xf32>
    %24 = vector.broadcast %23 : vector<16x1xf32> to vector<16x128xf32>
    %25 = arith.mulf %20, %24 : vector<16x128xf32>
    %c1 = arith.constant 1 : index
    %c0_11 = arith.constant 0 : index
    %26 = vector.load %arg3[%c1, %c0_11] : memref<3x128xf32, #tpu.memory_space<vmem>>, vector<1x128xf32>
    %27 = vector.broadcast %26 : vector<1x128xf32> to vector<16x128xf32>
    %28 = arith.mulf %25, %27 : vector<16x128xf32>
    %c2 = arith.constant 2 : index
    %c0_12 = arith.constant 0 : index
    %29 = vector.load %arg3[%c2, %c0_12] : memref<3x128xf32, #tpu.memory_space<vmem>>, vector<1x128xf32>
    %30 = vector.broadcast %29 : vector<1x128xf32> to vector<16x128xf32>
    %31 = arith.addf %28, %30 : vector<16x128xf32>
    %c0_13 = arith.constant 0 : index
    %c0_14 = arith.constant 0 : index
    %32 = vector.load %arg4[%c0_13, %c0_14] : memref<16x128xf32, #tpu.memory_space<vmem>>, vector<16x128xf32>
    tpu.vector_store %arg4[%c0_13, %c0_14], %31 {strides = array<i32>} : memref<16x128xf32, #tpu.memory_space<vmem>>, vector<16x128xf32>,
    return
  }
  func.func @transform_0(%arg0: i32) -> (i32, i32) {
    %c0_i32 = arith.constant 0 : i32
    %c0_i32_0 = arith.constant 0 : i32
    return %arg0, %c0_i32 : i32, i32
  }
  func.func @transform_1(%arg0: i32) -> (i32, i32) {
    %c0_i32 = arith.constant 0 : i32
    %c0_i32_0 = arith.constant 0 : i32
    %c0_i32_1 = arith.constant 0 : i32
    return %c0_i32, %c0_i32_0 : i32, i32
  }
  func.func @transform_2(%arg0: i32) -> (i32, i32) {
    %c0_i32 = arith.constant 0 : i32
    %c0_i32_0 = arith.constant 0 : i32
    %c0_i32_1 = arith.constant 0 : i32
    return %c0_i32, %c0_i32_0 : i32, i32
  }
  func.func @transform_3(%arg0: i32) -> (i32, i32) {
    %c0_i32 = arith.constant 0 : i32
    %c0_i32_0 = arith.constant 0 : i32
    return %arg0, %c0_i32 : i32, i32
  }
}

</mosaic_0001>

<llo_original>
// kernel: tpu_custom_call.1
$region0: #{tpu_custom_call.1}
  #allocation0 [shape = 'u32[]', space=smem, size = 0x4, offset = 0x4, fixed_abs, tag = 'smem constant byte address 0x4 - core index']
  #allocation1 [shape = 'u32[144,128]{1,0:T(1,128)}', space=vmem, size = 0x12000, scoped, tag = 'internal scratch']
  %s0 = inlined_call_operand.hbm [shape: f32[16,32], index: 0, kind: input, shape index: {}]
  %s1 = inlined_call_operand.hbm [shape: f32[32,128], index: 1, kind: input, shape index: {}]
  %s2 = inlined_call_operand.vmem [shape: f32[3,128], index: 2, kind: input, shape index: {}]
  %s3 = inlined_call_operand.hbm [shape: f32[16,128], index: 3, kind: output, shape index: {}]
  %s4 = sld [smem:[#allocation0]]
  $region30: #{tpu_custom_call.1} parent=0
    _
  %s6 = ssub.s32 1, %s4
  %s7 = scalar_select 0, %s6, %s4
  $region1: #{tpu_custom_call.1} parent=0
    #allocation2 [shape = 'u8[8192]{0}', space=vmem, size = 0x2000, scoped, tag = 'input window, operand 0, single buffered']
    #allocation3 [shape = 's32[1]{0}', space=sflag, size = 0x4, scoped, tag = 'scoped memory for tpu_custom_call.1']
    #allocation4 [shape = 's32[1]{0}', space=sflag, size = 0x4, scoped, tag = 'scoped memory for tpu_custom_call.1']
    #allocation5 [shape = 'u8[16384]{0}', space=vmem, size = 0x4000, scoped, tag = 'input window, operand 1, single buffered']
    #allocation6 [shape = 's32[1]{0}', space=sflag, size = 0x4, scoped, tag = 'scoped memory for tpu_custom_call.1']
    #allocation7 [shape = 'u8[8192]{0}', space=vmem, size = 0x2000, scoped, tag = 'output window, operand 0, single buffered']
    %8 = vsyncpa [#allocation3], 0
    %9 = vsyncpa [#allocation6], 0
    %10 = vsyncpa [#allocation4], 0
    // Predicated region
    $region2: #{tpu_custom_call.1} parent=1 // pred_check
      _
    $region3: #{tpu_custom_call.1} parent=1 // pred_check_branch
      %12 = sbr.rel (0) target = $region5
    $region4: #{tpu_custom_call.1} parent=1 // pred_region
      %s14 = ssub.s32 256, 256
      %15 = vsyncadd [#allocation3], %s14
      %s16 = sshll.u32 [#allocation2], 4
      %s17 = int_to_ptr.vmem [resolvable:$true] %s16
      %22 = dma.hbm_to_vmem [thread:$0]  %s0, 256, %s17, [#allocation3], 128, 128, 8
    $region5: #{tpu_custom_call.1} parent=1 // pred_fallthru
      _
    // Predicated region
    $region6: #{tpu_custom_call.1} parent=1 // pred_check
      _
    $region7: #{tpu_custom_call.1} parent=1 // pred_check_branch
      %24 = sbr.rel (0) target = $region9
    $region8: #{tpu_custom_call.1} parent=1 // pred_region
      %s26 = ssub.s32 512, 512
      %27 = vsyncadd [#allocation6], %s26
      %s28 = sshll.u32 [#allocation5], 4
      %s29 = int_to_ptr.vmem [resolvable:$true] %s28
      %34 = dma.hbm_to_vmem [thread:$0]  %s1, 512, %s29, [#allocation6], 128, 128, 8
    $region9: #{tpu_custom_call.1} parent=1 // pred_fallthru
      _
    // Predicated region
    $region10: #{tpu_custom_call.1} parent=1 // pred_check
      _
    $region11: #{tpu_custom_call.1} parent=1 // pred_check_branch
      %36 = sbr.rel (0) target = $region13
    $region12: #{tpu_custom_call.1} parent=1 // pred_region
      _
    $region13: #{tpu_custom_call.1} parent=1 // pred_fallthru
      _
    // Predicated region
    $region14: #{tpu_custom_call.1} parent=1 // pred_check
      _
    $region15: #{tpu_custom_call.1} parent=1 // pred_check_branch
      %38 = sbr.rel (0) target = $region17
    $region16: #{tpu_custom_call.1} parent=1 // pred_region
      %39 = dma.done [#allocation3], 256
    $region17: #{tpu_custom_call.1} parent=1 // pred_fallthru
      _
    // Predicated region
    $region18: #{tpu_custom_call.1} parent=1 // pred_check
      _
    $region19: #{tpu_custom_call.1} parent=1 // pred_check_branch
      %41 = sbr.rel (0) target = $region21
    $region20: #{tpu_custom_call.1} parent=1 // pred_region
      %42 = dma.done [#allocation6], 512
    $region21: #{tpu_custom_call.1} parent=1 // pred_fallthru
      _
    %v43 = vld [vmem:[#allocation2] sm:$0xff]
    %v44 = vld [vmem:[#allocation2 + $0x8] sm:$0xff]
    %v45 = vld [vmem:[#allocation5] sm:$0xff]
    %v46 = vld [vmem:[#allocation5 + $0x8] sm:$0xff]
    %v47 = vld [vmem:[#allocation5 + $0x10] sm:$0xff]
    %v48 = vld [vmem:[#allocation5 + $0x18] sm:$0xff]
    %v49 = vld [vmem:[%s2] sm:$0x1]
    %v50 = vlaneseq
    %v51 = vshrl.u32 %v50, 7
    %v52 = vsub.s32 0, %v51
    %v53 = vrot.slane %v49, %v52
    %vm54 = vcmask 261120
    %v56 = vsel %vm54, %v43, 0
    %v59 = vsel %vm54, %v44, 0
    %61 = vmatprep.subr.mxu0 0.0
    %62 = vmatpush1.msra.mxu0 %v45
    %63 = vmatprep.subr.mxu0 0.0
    %64 = vmatpush1.msra.mxu0 %v46
    %65 = vmatprep.subr.mxu0 0.0
    %66 = vmatpush1.msra.mxu0 %v47
    %67 = vmatprep.subr.mxu0 0.0
    %68 = vmatpush1.msra.mxu0 %v48
    %69 = vmatprep.subr.mxu0 0.0
    %70 = vmatpush1.msra.mxu0 0.0
    %71 = vmatprep.subr.mxu0 0.0
    %72 = vmatpush1.msra.mxu0 0.0
    %73 = vmatprep.subr.mxu0 0.0
    %74 = vmatpush1.msra.mxu0 0.0
    %75 = vmatprep.subr.mxu0 0.0
    %76 = vmatpush1.msra.mxu0 0.0
    %77 = vmatprep.subr.mxu0 0.0
    %78 = vmatpush1.msra.mxu0 0.0
    %79 = vmatprep.subr.mxu0 0.0
    %80 = vmatpush1.msra.mxu0 0.0
    %81 = vmatprep.subr.mxu0 0.0
    %82 = vmatpush1.msra.mxu0 0.0
    %83 = vmatprep.subr.mxu0 0.0
    %84 = vmatpush1.msra.mxu0 0.0
    %85 = vmatprep.subr.mxu0 0.0
    %86 = vmatpush1.msra.mxu0 0.0
    %87 = vmatprep.subr.mxu0 0.0
    %88 = vmatpush1.msra.mxu0 0.0
    %89 = vmatprep.subr.mxu0 0.0
    %90 = vmatpush1.msra.mxu0 0.0
    %91 = vmatprep.subr.mxu0 0.0
    %92 = vmatpush1.msra.mxu0 0.0
    %93 = vmatprep.subr.mxu0 0.0
    %94 = vmatpush1.msra.mxu0 0.0
    %95 = vmatprep.subr.mxu0 0.0
    %96 = vmatpush1.msra.mxu0 0.0
    %97 = vmatprep.subr.mxu0 0.0
    %98 = vmatpush1.msra.mxu0 0.0
    %99 = vmatprep.subr.mxu0 0.0
    %100 = vmatpush1.msra.mxu0 0.0
    %101 = vmatprep.subr.mxu0 0.0
    %102 = vmatpush1.msra.mxu0 0.0
    %103 = vmatprep.subr.mxu0 0.0
    %104 = vmatpush1.msra.mxu0 0.0
    %105 = vmatprep.subr.mxu0 0.0
    %106 = vmatpush1.msra.mxu0 0.0
    %107 = vmatprep.subr.mxu0 0.0
    %108 = vmatpush1.msra.mxu0 0.0
    %109 = vmatprep.subr.mxu0 0.0
    %110 = vmatpush1.msra.mxu0 0.0
    %111 = vmatprep.subr.mxu0 0.0
    %112 = vmatpush1.msra.mxu0 0.0
    %113 = vmatprep.subr.mxu0 0.0
    %114 = vmatpush1.msra.mxu0 0.0
    %115 = vmatprep.subr.mxu0 0.0
    %116 = vmatpush1.msra.mxu0 0.0
    %117 = vmatprep.subr.mxu0 0.0
    %118 = vmatpush1.msra.mxu0 0.0
    %119 = vmatprep.subr.mxu0 0.0
    %120 = vmatpush1.msra.mxu0 0.0
    %121 = vmatprep.subr.mxu0 0.0
    %122 = vmatpush1.msra.mxu0 0.0
    %123 = vmatprep.subr.mxu0 0.0
    %124 = vmatpush1.msra.mxu0 0.0
    %125 = vmatprep.mubr.f32.mxu0 0.0
    %126 = vmatmul.mubr.f32.gmra.mrb[0].mxu0 %v56
    %v127 = vpop.f32.mrb[0].mxu0
    %v128 = vadd.f32 %v53, %v127
    %v129 = vpop.f32.mrb[0].mxu0
    %130 = vmatprep.mubr.f32.mxu0 0.0
    %131 = vmatmul.mubr.f32.gmra.mrb[0].mxu0 %v59
    %v132 = vpop.f32.mrb[0].mxu0
    %v133 = vadd.f32 %v53, %v132
    %v134 = vpop.f32.mrb[0].mxu0
    %135 = vdwg.mxu0
    %v136 = vmax.f32 %v128, 0.0
    %v137 = vmax.f32 %v133, 0.0
    %138 = vadd.xlane.f32.xlu0 %v136
    %v139 = vpop.xlane.xlu0 %138
    %140 = vadd.xlane.f32.xlu0 %v137
    %v141 = vpop.xlane.xlu0 %140
    %v142 = vmul.f32 %v139, 0.0078125
    %v143 = vmul.f32 %v141, 0.0078125
    %v144 = vmul.f32 %v136, %v136
    %v145 = vmul.f32 %v137, %v137
    %146 = vadd.xlane.f32.xlu0 %v144
    %v147 = vpop.xlane.xlu0 %146
    %148 = vadd.xlane.f32.xlu0 %v145
    %v149 = vpop.xlane.xlu0 %148
    %v150 = vmul.f32 %v147, 0.0078125
    %v151 = vmul.f32 %v149, 0.0078125
    %v152 = vmul.f32 %v142, %v142
    %v153 = vmul.f32 %v143, %v143
    %v154 = vsub.f32 %v150, %v152
    %v155 = vsub.f32 %v151, %v153
    %v156 = vsub.f32 %v136, %v142
    %v157 = vsub.f32 %v137, %v143
    %v158 = vadd.f32 %v154, 1e-05
    %v159 = vadd.f32 %v155, 1e-05
    %v160 = vrsqrt.pop %v158
    %v161 = vrsqrt.pop %v159
    %v162 = vmul.f32 %v156, %v160
    %v163 = vmul.f32 %v157, %v161
    %v164 = vld [vmem:[%s2 + $0x1] sm:$0x1]
    %v165 = vlaneseq
    %v166 = vshrl.u32 %v165, 7
    %v167 = vsub.s32 0, %v166
    %v168 = vrot.slane %v164, %v167
    %v169 = vmul.f32 %v162, %v168
    %v170 = vmul.f32 %v163, %v168
    %v171 = vld [vmem:[%s2 + $0x2] sm:$0x1]
    %v172 = vlaneseq
    %v173 = vshrl.u32 %v172, 7
    %v174 = vsub.s32 0, %v173
    %v175 = vrot.slane %v171, %v174
    %v176 = vadd.f32 %v169, %v175
    %v177 = vadd.f32 %v170, %v175
    %178 = vst [vmem:[#allocation7] sm:$0xff] %v176
    %179 = vst [vmem:[#allocation7 + $0x8] sm:$0xff] %v177
    // Predicated region
    $region22: #{tpu_custom_call.1} parent=1 // pred_check
      _
    $region23: #{tpu_custom_call.1} parent=1 // pred_check_branch
      %181 = sbr.rel (0) target = $region25
    $region24: #{tpu_custom_call.1} parent=1 // pred_region
      %s183 = ssub.s32 256, 256
      %184 = vsyncadd [#allocation4], %s183
      %s185 = sshll.u32 [#allocation7], 4
      %s186 = int_to_ptr.vmem [resolvable:$true] %s185
      %191 = dma.vmem_to_hbm [thread:$0]  %s186, 256, %s3, [#allocation4], 128, 128, 8
    $region25: #{tpu_custom_call.1} parent=1 // pred_fallthru
      _
    // Predicated region
    $region26: #{tpu_custom_call.1} parent=1 // pred_check
      _
    $region27: #{tpu_custom_call.1} parent=1 // pred_check_branch
      %193 = sbr.rel (0) target = $region29
    $region28: #{tpu_custom_call.1} parent=1 // pred_region
      %194 = dma.done [#allocation4], 256
    $region29: #{tpu_custom_call.1} parent=1 // pred_fallthru
      _
    %195 = vsyncpa [#allocation3], 1
    %196 = vsyncpa [#allocation6], 1
    %197 = vsyncpa [#allocation4], 1

// kernel: tpu_custom_call.1
$region0: #{tpu_custom_call.1}
  #allocation0 [shape = 'u32[]', space=smem, size = 0x4, offset = 0x4, fixed_abs, tag = 'smem constant byte address 0x4 - core index']
  #allocation1 [shape = 'u32[144,128]{1,0:T(1,128)}', space=vmem, size = 0x12000, scoped, tag = 'internal scratch']
  %s0 = inlined_call_operand.hbm [shape: f32[16,32], index: 0, kind: input, shape index: {}]
  %s1 = inlined_call_operand.hbm [shape: f32[32,128], index: 1, kind: input, shape index: {}]
  %s2 = inlined_call_operand.vmem [shape: f32[3,128], index: 2, kind: input, shape index: {}]
  %s3 = inlined_call_operand.hbm [shape: f32[16,128], index: 3, kind: output, shape index: {}]
  %s4 = sld [smem:[#allocation0]]
  $region30: #{tpu_custom_call.1} parent=0
    _
  %s6 = ssub.s32 1, %s4
  %s7 = scalar_select 0, %s6, %s4
  $region1: #{tpu_custom_call.1} parent=0
    #allocation2 [shape = 'u8[8192]{0}', space=vmem, size = 0x2000, scoped, tag = 'input window, operand 0, single buffered']
    #allocation3 [shape = 's32[1]{0}', space=sflag, size = 0x4, scoped, tag = 'scoped memory for tpu_custom_call.1']
    #allocation4 [shape = 's32[1]{0}', space=sflag, size = 0x4, scoped, tag = 'scoped memory for tpu_custom_call.1']
    #allocation5 [shape = 'u8[16384]{0}', space=vmem, size = 0x4000, scoped, tag = 'input window, operand 1, single buffered']
    #allocation6 [shape = 's32[1]{0}', space=sflag, size = 0x4, scoped, tag = 'scoped memory for tpu_custom_call.1']
    #allocation7 [shape = 'u8[8192]{0}', space=vmem, size = 0x2000, scoped, tag = 'output window, operand 0, single buffered']
    %8 = vsyncpa [#allocation3], 0
    %9 = vsyncpa [#allocation6], 0
    %10 = vsyncpa [#allocation4], 0
    // Predicated region
    $region2: #{tpu_custom_call.1} parent=1 // pred_check
      _
    $region3: #{tpu_custom_call.1} parent=1 // pred_check_branch
      %12 = sbr.rel (0) target = $region5
    $region4: #{tpu_custom_call.1} parent=1 // pred_region
      %s14 = ssub.s32 256, 256
      %15 = vsyncadd [#allocation3], %s14
      %s16 = sshll.u32 [#allocation2], 4
      %s17 = int_to_ptr.vmem [resolvable:$true] %s16
      %22 = dma.hbm_to_vmem [thread:$0]  %s0, 256, %s17, [#allocation3], 128, 128, 8
    $region5: #{tpu_custom_call.1} parent=1 // pred_fallthru
      _
    // Predicated region
    $region6: #{tpu_custom_call.1} parent=1 // pred_check
      _
    $region7: #{tpu_custom_call.1} parent=1 // pred_check_branch
      %24 = sbr.rel (0) target = $region9
    $region8: #{tpu_custom_call.1} parent=1 // pred_region
      %s26 = ssub.s32 512, 512
      %27 = vsyncadd [#allocation6], %s26
      %s28 = sshll.u32 [#allocation5], 4
      %s29 = int_to_ptr.vmem [resolvable:$true] %s28
      %34 = dma.hbm_to_vmem [thread:$0]  %s1, 512, %s29, [#allocation6], 128, 128, 8
    $region9: #{tpu_custom_call.1} parent=1 // pred_fallthru
      _
    // Predicated region
    $region10: #{tpu_custom_call.1} parent=1 // pred_check
      _
    $region11: #{tpu_custom_call.1} parent=1 // pred_check_branch
      %36 = sbr.rel (0) target = $region13
    $region12: #{tpu_custom_call.1} parent=1 // pred_region
      _
    $region13: #{tpu_custom_call.1} parent=1 // pred_fallthru
      _
    // Predicated region
    $region14: #{tpu_custom_call.1} parent=1 // pred_check
      _
    $region15: #{tpu_custom_call.1} parent=1 // pred_check_branch
      %38 = sbr.rel (0) target = $region17
    $region16: #{tpu_custom_call.1} parent=1 // pred_region
      %39 = dma.done [#allocation3], 256
    $region17: #{tpu_custom_call.1} parent=1 // pred_fallthru
      _
    // Predicated region
    $region18: #{tpu_custom_call.1} parent=1 // pred_check
      _
    $region19: #{tpu_custom_call.1} parent=1 // pred_check_branch
      %41 = sbr.rel (0) target = $region21
    $region20: #{tpu_custom_call.1} parent=1 // pred_region
      %42 = dma.done [#allocation6], 512
    $region21: #{tpu_custom_call.1} parent=1 // pred_fallthru
      _
    %v43 = vld [vmem:[#allocation2] sm:$0xff]
    %v44 = vld [vmem:[#allocation2 + $0x8] sm:$0xff]
    %v45 = vld [vmem:[#allocation5] sm:$0xff]
    %v46 = vld [vmem:[#allocation5 + $0x8] sm:$0xff]
    %v47 = vld [vmem:[#allocation5 + $0x10] sm:$0xff]
    %v48 = vld [vmem:[#allocation5 + $0x18] sm:$0xff]
    %v49 = vld [vmem:[%s2] sm:$0x1]
    %v50 = vlaneseq
    %v51 = vshrl.u32 %v50, 7
    %v52 = vsub.s32 0, %v51
    %v53 = vrot.slane %v49, %v52
    %vm54 = vcmask 261120
    %v56 = vsel %vm54, %v43, 0
    %v59 = vsel %vm54, %v44, 0
    %61 = vmatprep.subr.mxu0 0.0
    %62 = vmatpush1.msra.mxu0 %v45
    %63 = vmatprep.subr.mxu0 0.0
    %64 = vmatpush1.msra.mxu0 %v46
    %65 = vmatprep.subr.mxu0 0.0
    %66 = vmatpush1.msra.mxu0 %v47
    %67 = vmatprep.subr.mxu0 0.0
    %68 = vmatpush1.msra.mxu0 %v48
    %69 = vmatprep.subr.mxu0 0.0
    %70 = vmatpush1.msra.mxu0 0.0
    %71 = vmatprep.subr.mxu0 0.0
    %72 = vmatpush1.msra.mxu0 0.0
    %73 = vmatprep.subr.mxu0 0.0
    %74 = vmatpush1.msra.mxu0 0.0
    %75 = vmatprep.subr.mxu0 0.0
    %76 = vmatpush1.msra.mxu0 0.0
    %77 = vmatprep.subr.mxu0 0.0
    %78 = vmatpush1.msra.mxu0 0.0
    %79 = vmatprep.subr.mxu0 0.0
    %80 = vmatpush1.msra.mxu0 0.0
    %81 = vmatprep.subr.mxu0 0.0
    %82 = vmatpush1.msra.mxu0 0.0
    %83 = vmatprep.subr.mxu0 0.0
    %84 = vmatpush1.msra.mxu0 0.0
    %85 = vmatprep.subr.mxu0 0.0
    %86 = vmatpush1.msra.mxu0 0.0
    %87 = vmatprep.subr.mxu0 0.0
    %88 = vmatpush1.msra.mxu0 0.0
    %89 = vmatprep.subr.mxu0 0.0
    %90 = vmatpush1.msra.mxu0 0.0
    %91 = vmatprep.subr.mxu0 0.0
    %92 = vmatpush1.msra.mxu0 0.0
    %93 = vmatprep.subr.mxu0 0.0
    %94 = vmatpush1.msra.mxu0 0.0
    %95 = vmatprep.subr.mxu0 0.0
    %96 = vmatpush1.msra.mxu0 0.0
    %97 = vmatprep.subr.mxu0 0.0
    %98 = vmatpush1.msra.mxu0 0.0
    %99 = vmatprep.subr.mxu0 0.0
    %100 = vmatpush1.msra.mxu0 0.0
    %101 = vmatprep.subr.mxu0 0.0
    %102 = vmatpush1.msra.mxu0 0.0
    %103 = vmatprep.subr.mxu0 0.0
    %104 = vmatpush1.msra.mxu0 0.0
    %105 = vmatprep.subr.mxu0 0.0
    %106 = vmatpush1.msra.mxu0 0.0
    %107 = vmatprep.subr.mxu0 0.0
    %108 = vmatpush1.msra.mxu0 0.0
    %109 = vmatprep.subr.mxu0 0.0
    %110 = vmatpush1.msra.mxu0 0.0
    %111 = vmatprep.subr.mxu0 0.0
    %112 = vmatpush1.msra.mxu0 0.0
    %113 = vmatprep.subr.mxu0 0.0
    %114 = vmatpush1.msra.mxu0 0.0
    %115 = vmatprep.subr.mxu0 0.0
    %116 = vmatpush1.msra.mxu0 0.0
    %117 = vmatprep.subr.mxu0 0.0
    %118 = vmatpush1.msra.mxu0 0.0
    %119 = vmatprep.subr.mxu0 0.0
    %120 = vmatpush1.msra.mxu0 0.0
    %121 = vmatprep.subr.mxu0 0.0
    %122 = vmatpush1.msra.mxu0 0.0
    %123 = vmatprep.subr.mxu0 0.0
    %124 = vmatpush1.msra.mxu0 0.0
    %125 = vmatprep.mubr.f32.mxu0 0.0
    %126 = vmatmul.mubr.f32.gmra.mrb[0].mxu0 %v56
    %v127 = vpop.f32.mrb[0].mxu0
    %v128 = vadd.f32 %v53, %v127
    %v129 = vpop.f32.mrb[0].mxu0
    %130 = vmatprep.mubr.f32.mxu0 0.0
    %131 = vmatmul.mubr.f32.gmra.mrb[0].mxu0 %v59
    %v132 = vpop.f32.mrb[0].mxu0
    %v133 = vadd.f32 %v53, %v132
    %v134 = vpop.f32.mrb[0].mxu0
    %135 = vdwg.mxu0
    %v136 = vmax.f32 %v128, 0.0
    %v137 = vmax.f32 %v133, 0.0
    %138 = vadd.xlane.f32.xlu0 %v136
    %v139 = vpop.xlane.xlu0 %138
    %140 = vadd.xlane.f32.xlu0 %v137
    %v141 = vpop.xlane.xlu0 %140
    %v142 = vmul.f32 %v139, 0.0078125
    %v143 = vmul.f32 %v141, 0.0078125
    %v144 = vmul.f32 %v136, %v136
    %v145 = vmul.f32 %v137, %v137
    %146 = vadd.xlane.f32.xlu0 %v144
    %v147 = vpop.xlane.xlu0 %146
    %148 = vadd.xlane.f32.xlu0 %v145
    %v149 = vpop.xlane.xlu0 %148
    %v150 = vmul.f32 %v147, 0.0078125
    %v151 = vmul.f32 %v149, 0.0078125
    %v152 = vmul.f32 %v142, %v142
    %v153 = vmul.f32 %v143, %v143
    %v154 = vsub.f32 %v150, %v152
    %v155 = vsub.f32 %v151, %v153
    %v156 = vsub.f32 %v136, %v142
    %v157 = vsub.f32 %v137, %v143
    %v158 = vadd.f32 %v154, 1e-05
    %v159 = vadd.f32 %v155, 1e-05
    %v160 = vrsqrt.pop %v158
    %v161 = vrsqrt.pop %v159
    %v162 = vmul.f32 %v156, %v160
    %v163 = vmul.f32 %v157, %v161
    %v164 = vld [vmem:[%s2 + $0x1] sm:$0x1]
    %v165 = vlaneseq
    %v166 = vshrl.u32 %v165, 7
    %v167 = vsub.s32 0, %v166
    %v168 = vrot.slane %v164, %v167
    %v169 = vmul.f32 %v162, %v168
    %v170 = vmul.f32 %v163, %v168
    %v171 = vld [vmem:[%s2 + $0x2] sm:$0x1]
    %v172 = vlaneseq
    %v173 = vshrl.u32 %v172, 7
    %v174 = vsub.s32 0, %v173
    %v175 = vrot.slane %v171, %v174
    %v176 = vadd.f32 %v169, %v175
    %v177 = vadd.f32 %v170, %v175
    %178 = vst [vmem:[#allocation7] sm:$0xff] %v176
    %179 = vst [vmem:[#allocation7 + $0x8] sm:$0xff] %v177
    // Predicated region
    $region22: #{tpu_custom_call.1} parent=1 // pred_check
      _
    $region23: #{tpu_custom_call.1} parent=1 // pred_check_branch
      %181 = sbr.rel (0) target = $region25
    $region24: #{tpu_custom_call.1} parent=1 // pred_region
      %s183 = ssub.s32 256, 256
      %184 = vsyncadd [#allocation4], %s183
      %s185 = sshll.u32 [#allocation7], 4
      %s186 = int_to_ptr.vmem [resolvable:$true] %s185
      %191 = dma.vmem_to_hbm [thread:$0]  %s186, 256, %s3, [#allocation4], 128, 128, 8
    $region25: #{tpu_custom_call.1} parent=1 // pred_fallthru
      _
    // Predicated region
    $region26: #{tpu_custom_call.1} parent=1 // pred_check
      _
    $region27: #{tpu_custom_call.1} parent=1 // pred_check_branch
      %193 = sbr.rel (0) target = $region29
    $region28: #{tpu_custom_call.1} parent=1 // pred_region
      %194 = dma.done [#allocation4], 256
    $region29: #{tpu_custom_call.1} parent=1 // pred_fallthru
      _
    %195 = vsyncpa [#allocation3], 1
    %196 = vsyncpa [#allocation6], 1
    %197 = vsyncpa [#allocation4], 1

</llo_original>
